<compile_context>
chip_gen: v6e
topology: v6e:2x2x1
jax: 0.10.0
libtpu: 0.0.40
codegen_flags: <defaults>
</compile_context>

<pallas_src>
import jax
import jax.numpy as jnp
from jax.experimental import pallas as pl
from jax.experimental.pallas import tpu as pltpu

# -------- small, lane-aligned stand-in dimensions --------
NUM_LABELS  = 16      # shapenetcore categories
CLIP_DIM    = 128     # stand-in for CLIP's 512-dim text embedding
REDUCED_DIM = 128     # output dim of dim_reduction linear
B           = 2       # batch
N_POINTS    = 64      # points per cloud
D_IN        = 16      # per-point encoded feature dim
H_DIM       = 128     # point MLP hidden dim
FEAT_DIM    = 128     # point-cloud feature dim


# ------------------------------------------------------------------
# Fused kernel:
#   text branch : gather label_latents rows (indices from SMEM) -> @ W_red + b_red
#   point branch: flattened per-point MLP (D_IN -> H -> H, ReLU) ->
#                 per-batch max-pool over points -> linear (H -> FEAT)
# ------------------------------------------------------------------
def _fused_clip_kernel(labels_ref, lat_ref, w_red_ref, b_red_ref,
                       x_ref, w1_ref, b1_ref, w2_ref, b2_ref, w3_ref, b3_ref,
                       o_text_ref, o_pc_ref):
    # ---- text features ----
    # labels_ref: (B,) int32 in SMEM; lat_ref: (NUM_LABELS, CLIP_DIM) in VMEM.
    rows = [lat_ref[pl.ds(labels_ref[b], 1), :] for b in range(B)]   # each (1, CLIP_DIM)
    gathered = jnp.concatenate(rows, axis=0)                          # (B, CLIP_DIM)
    text = jnp.dot(gathered, w_red_ref[...],
                   preferred_element_type=jnp.float32) + b_red_ref[...]
    o_text_ref[...] = text.astype(o_text_ref.dtype)                   # full-tile store

    # ---- point cloud features ----
    # x_ref: (B*N_POINTS, D_IN) — flattened row-major, batch-major.
    x = x_ref[...]
    h = jnp.dot(x, w1_ref[...], preferred_element_type=jnp.float32) + b1_ref[...]
    h = jnp.maximum(h, 0.0)                                           # (B*N, H_DIM)
    h = jnp.dot(h, w2_ref[...], preferred_element_type=jnp.float32) + b2_ref[...]
    h = jnp.maximum(h, 0.0)                                           # (B*N, H_DIM)
    # per-batch max-pool over points via static sublane slices (row-major, batch-major order)
    pooled = jnp.concatenate(
        [jnp.max(h[b * N_POINTS:(b + 1) * N_POINTS, :], axis=0, keepdims=True)
         for b in range(B)],
        axis=0)                                                       # (B, H_DIM)
    feat = jnp.dot(pooled, w3_ref[...], preferred_element_type=jnp.float32) + b3_ref[...]
    o_pc_ref[...] = feat.astype(o_pc_ref.dtype)                       # full-tile store


def fused_forward_kernel(labels, label_latents, w_red, b_red,
                         points_flat, w1, b1, w2, b2, w3, b3):
    vmem = pl.BlockSpec(memory_space=pltpu.MemorySpace.VMEM)
    smem = pl.BlockSpec(memory_space=pltpu.MemorySpace.SMEM)
    return pl.pallas_call(
        _fused_clip_kernel,
        out_shape=(jax.ShapeDtypeStruct((B, REDUCED_DIM), jnp.float32),
                   jax.ShapeDtypeStruct((B, FEAT_DIM), jnp.float32)),
        in_specs=[
            smem,   # labels
            vmem,   # label_latents
            vmem,   # w_red
            vmem,   # b_red
            vmem,   # points_flat
            vmem,   # w1
            vmem,   # b1
            vmem,   # w2
            vmem,   # b2
            vmem,   # w3
            vmem,   # b3
        ],
        out_specs=(vmem, vmem),
    )(labels, label_latents, w_red, b_red,
      points_flat, w1, b1, w2, b2, w3, b3)


# ------------------------------------------------------------------
# Module wrapper (glue in plain JAX: parameter setup + flattening)
# ------------------------------------------------------------------
def init_params(key):
    ks = jax.random.split(key, 9)
    s = 0.02
    return dict(
        label_latents=jax.random.normal(ks[0], (NUM_LABELS, CLIP_DIM), jnp.float32),
        w_red=jax.random.normal(ks[1], (CLIP_DIM, REDUCED_DIM), jnp.float32) * s,
        b_red=jax.random.normal(ks[2], (REDUCED_DIM,), jnp.float32) * s,
        w1=jax.random.normal(ks[3], (D_IN, H_DIM), jnp.float32) * s,
        b1=jax.random.normal(ks[4], (H_DIM,), jnp.float32) * s,
        w2=jax.random.normal(ks[5], (H_DIM, H_DIM), jnp.float32) * s,
        b2=jax.random.normal(ks[6], (H_DIM,), jnp.float32) * s,
        w3=jax.random.normal(ks[7], (H_DIM, FEAT_DIM), jnp.float32) * s,
        b3=jax.random.normal(ks[8], (FEAT_DIM,), jnp.float32) * s,
    )


def forward(params, labels, encoded_points):
    # compute_label_features: torch.stack([label_latents[i] for i in labels]).squeeze(-1)
    # (.squeeze(-1) is a no-op since the last dim is CLIP_DIM != 1).  The gather itself is
    # done inside the fused kernel via SMEM-resident label indices.
    points_flat = encoded_points.reshape(B * N_POINTS, D_IN)  # wrapper-side reshape is free
    text_features, point_cloud_features = fused_forward_kernel(
        labels.astype(jnp.int32), params["label_latents"],
        params["w_red"], params["b_red"].reshape(1, REDUCED_DIM),
        points_flat,
        params["w1"], params["b1"].reshape(1, H_DIM),
        params["w2"], params["b2"].reshape(1, H_DIM),
        params["w3"], params["b3"].reshape(1, FEAT_DIM))
    return text_features, point_cloud_features


def forward_ref(params, labels, encoded_points):
    hp = jax.lax.Precision.HIGHEST
    gathered = jnp.take(params["label_latents"], labels, axis=0)
    text = jnp.dot(gathered, params["w_red"], precision=hp) + params["b_red"]
    h = jnp.maximum(
        jnp.einsum("bnd,dh->bnh", encoded_points, params["w1"], precision=hp) + params["b1"], 0.0)
    h = jnp.maximum(
        jnp.einsum("bnh,hk->bnk", h, params["w2"], precision=hp) + params["b2"], 0.0)
    pooled = jnp.max(h, axis=1)
    pc = jnp.dot(pooled, params["w3"], precision=hp) + params["b3"]
    return text, pc


if __name__ == "__main__":
    key = jax.random.PRNGKey(0)
    pkey, lkey, xkey = jax.random.split(key, 3)
    params = init_params(pkey)
    labels = jax.random.randint(lkey, (B,), 0, NUM_LABELS, dtype=jnp.int32)
    encoded_points = jax.random.normal(xkey, (B, N_POINTS, D_IN), jnp.float32)

    text_features, pc_features = forward(params, labels, encoded_points)
    jax.block_until_ready((text_features, pc_features))

    ref_text, ref_pc = forward_ref(params, labels, encoded_points)
    assert text_features.shape == (B, REDUCED_DIM)
    assert pc_features.shape == (B, FEAT_DIM)
    assert jnp.allclose(text_features, ref_text, atol=1e-4, rtol=1e-4)
    assert jnp.allclose(pc_features, ref_pc, atol=1e-4, rtol=1e-4)
    print("KERNEL_OK")
</pallas_src>

<mosaic_0001>
module attributes {stable_mosaic.version = 11 : i64} {
  func.func @_fused_clip_kernel(%arg0: memref<2xi32, #tpu.memory_space<smem>>, %arg1: memref<16x128xf32, #tpu.memory_space<vmem>>, %arg2: memref<128x128xf32, #tpu.memory_space<vmem>>, %arg3: memref<1x128xf32, #tpu.memory_space<vmem>>, %arg4: memref<128x16xf32, #tpu.memory_space<vmem>>, %arg5: memref<16x128xf32, #tpu.memory_space<vmem>>, %arg6: memref<1x128xf32, #tpu.memory_space<vmem>>, %arg7: memref<128x128xf32, #tpu.memory_space<vmem>>, %arg8: memref<1x128xf32, #tpu.memory_space<vmem>>, %arg9: memref<128x128xf32, #tpu.memory_space<vmem>>, %arg10: memref<1x128xf32, #tpu.memory_space<vmem>>, %arg11: memref<2x128xf32, #tpu.memory_space<vmem>>, %arg12: memref<2x128xf32, #tpu.memory_space<vmem>>) attributes {dimension_semantics = [], scalar_prefetch = 0 : i64, scratch_operands = 0 : i64, tpu.core_type = #tpu.core_type<tc>} {
    %c0 = arith.constant 0 : index
    %0 = memref.load %arg0[%c0] : memref<2xi32, #tpu.memory_space<smem>>
    %1 = arith.index_cast %0 : i32 to index
    %c0_0 = arith.constant 0 : index
    %2 = vector.load %arg1[%1, %c0_0] : memref<16x128xf32, #tpu.memory_space<vmem>>, vector<1x128xf32>
    %c1 = arith.constant 1 : index
    %3 = memref.load %arg0[%c1] : memref<2xi32, #tpu.memory_space<smem>>
    %4 = arith.index_cast %3 : i32 to index
    %c0_1 = arith.constant 0 : index
    %5 = vector.load %arg1[%4, %c0_1] : memref<16x128xf32, #tpu.memory_space<vmem>>, vector<1x128xf32>
    %6 = tpu.concatenate %2, %5 in 0 : vector<1x128xf32>, vector<1x128xf32> -> vector<2x128xf32>
    %c0_2 = arith.constant 0 : index
    %c0_3 = arith.constant 0 : index
    %7 = vector.load %arg2[%c0_2, %c0_3] : memref<128x128xf32, #tpu.memory_space<vmem>>, vector<128x128xf32>
    %cst = arith.constant dense<0.000000e+00> : vector<2x128xf32>
    %8 = tpu.matmul %6, %7, %cst {dimension_numbers = #tpu.dot_dimension_numbers<[1], [0], [0], [1], [0, 0, 1, 1], [], []>} : vector<2x128xf32>, vector<128x128xf32>, vector<2x128xf32> -> vector<2x128xf32>
    %c0_4 = arith.constant 0 : index
    %c0_5 = arith.constant 0 : index
    %9 = vector.load %arg3[%c0_4, %c0_5] : memref<1x128xf32, #tpu.memory_space<vmem>>, vector<1x128xf32>
    %10 = vector.broadcast %9 : vector<1x128xf32> to vector<2x128xf32>
    %11 = arith.addf %8, %10 : vector<2x128xf32>
    %c0_6 = arith.constant 0 : index
    %c0_7 = arith.constant 0 : index
    %12 = vector.load %arg11[%c0_6, %c0_7] : memref<2x128xf32, #tpu.memory_space<vmem>>, vector<2x128xf32>
    tpu.vector_store %arg11[%c0_6, %c0_7], %11 {strides = array<i32>} : memref<2x128xf32, #tpu.memory_space<vmem>>, vector<2x128xf32>,
    %c0_8 = arith.constant 0 : index
    %c0_9 = arith.constant 0 : index
    %13 = vector.load %arg4[%c0_8, %c0_9] : memref<128x16xf32, #tpu.memory_space<vmem>>, vector<128x16xf32>
    %c0_10 = arith.constant 0 : index
    %c0_11 = arith.constant 0 : index
    %14 = vector.load %arg5[%c0_10, %c0_11] : memref<16x128xf32, #tpu.memory_space<vmem>>, vector<16x128xf32>
    %cst_12 = arith.constant dense<0.000000e+00> : vector<128x128xf32>
    %15 = tpu.matmul %13, %14, %cst_12 {dimension_numbers = #tpu.dot_dimension_numbers<[1], [0], [0], [1], [0, 0, 1, 1], [], []>} : vector<128x16xf32>, vector<16x128xf32>, vector<128x128xf32> -> vector<128x128xf32>
    %c0_13 = arith.constant 0 : index
    %c0_14 = arith.constant 0 : index
    %16 = vector.load %arg6[%c0_13, %c0_14] : memref<1x128xf32, #tpu.memory_space<vmem>>, vector<1x128xf32>
    %17 = vector.broadcast %16 : vector<1x128xf32> to vector<128x128xf32>
    %18 = arith.addf %15, %17 : vector<128x128xf32>
    %cst_15 = arith.constant 0.000000e+00 : f32
    %19 = vector.broadcast %cst_15 : f32 to vector<128x128xf32>
    %20 = arith.maximumf %18, %19 : vector<128x128xf32>
    %c0_16 = arith.constant 0 : index
    %c0_17 = arith.constant 0 : index
    %21 = vector.load %arg7[%c0_16, %c0_17] : memref<128x128xf32, #tpu.memory_space<vmem>>, vector<128x128xf32>
    %cst_18 = arith.constant dense<0.000000e+00> : vector<128x128xf32>
    %22 = tpu.matmul %20, %21, %cst_18 {dimension_numbers = #tpu.dot_dimension_numbers<[1], [0], [0], [1], [0, 0, 1, 1], [], []>} : vector<128x128xf32>, vector<128x128xf32>, vector<128x128xf32> -> vector<128x128xf32>
    %c0_19 = arith.constant 0 : index
    %c0_20 = arith.constant 0 : index
    %23 = vector.load %arg8[%c0_19, %c0_20] : memref<1x128xf32, #tpu.memory_space<vmem>>, vector<1x128xf32>
    %24 = vector.broadcast %23 : vector<1x128xf32> to vector<128x128xf32>
    %25 = arith.addf %22, %24 : vector<128x128xf32>
    %cst_21 = arith.constant 0.000000e+00 : f32
    %26 = vector.broadcast %cst_21 : f32 to vector<128x128xf32>
    %27 = arith.maximumf %25, %26 : vector<128x128xf32>
    %28 = vector.extract_strided_slice %27 {offsets = [0, 0], sizes = [64, 128], strides = [1, 1]} : vector<128x128xf32> to vector<64x128xf32>
    %cst_22 = arith.constant dense<0xFF800000> : vector<128xf32>
    %29 = vector.multi_reduction <maximumf>, %28, %cst_22 [0] : vector<64x128xf32> to vector<128xf32>
    %30 = vector.shape_cast %29 : vector<128xf32> to vector<1x128xf32>
    %31 = vector.extract_strided_slice %27 {offsets = [64, 0], sizes = [64, 128], strides = [1, 1]} : vector<128x128xf32> to vector<64x128xf32>
    %cst_23 = arith.constant dense<0xFF800000> : vector<128xf32>
    %32 = vector.multi_reduction <maximumf>, %31, %cst_23 [0] : vector<64x128xf32> to vector<128xf32>
    %33 = vector.shape_cast %32 : vector<128xf32> to vector<1x128xf32>
    %34 = tpu.concatenate %30, %33 in 0 : vector<1x128xf32>, vector<1x128xf32> -> vector<2x128xf32>
    %c0_24 = arith.constant 0 : index
    %c0_25 = arith.constant 0 : index
    %35 = vector.load %arg9[%c0_24, %c0_25] : memref<128x128xf32, #tpu.memory_space<vmem>>, vector<128x128xf32>
    %cst_26 = arith.constant dense<0.000000e+00> : vector<2x128xf32>
    %36 = tpu.matmul %34, %35, %cst_26 {dimension_numbers = #tpu.dot_dimension_numbers<[1], [0], [0], [1], [0, 0, 1, 1], [], []>} : vector<2x128xf32>, vector<128x128xf32>, vector<2x128xf32> -> vector<2x128xf32>
    %c0_27 = arith.constant 0 : index
    %c0_28 = arith.constant 0 : index
    %37 = vector.load %arg10[%c0_27, %c0_28] : memref<1x128xf32, #tpu.memory_space<vmem>>, vector<1x128xf32>
    %38 = vector.broadcast %37 : vector<1x128xf32> to vector<2x128xf32>
    %39 = arith.addf %36, %38 : vector<2x128xf32>
    %c0_29 = arith.constant 0 : index
    %c0_30 = arith.constant 0 : index
    %40 = vector.load %arg12[%c0_29, %c0_30] : memref<2x128xf32, #tpu.memory_space<vmem>>, vector<2x128xf32>
    tpu.vector_store %arg12[%c0_29, %c0_30], %39 {strides = array<i32>} : memref<2x128xf32, #tpu.memory_space<vmem>>, vector<2x128xf32>,
    return
  }
}

</mosaic_0001>

<llo_original>
// kernel: tpu_custom_call.1
$region0: #{tpu_custom_call.1}
  #allocation0 [shape = 'u32[]', space=smem, size = 0x4, offset = 0x4, fixed_abs, tag = 'smem constant byte address 0x4 - core index']
  #allocation1 [shape = 'u32[144,128]{1,0:T(1,128)}', space=vmem, size = 0x12000, scoped, tag = 'internal scratch']
  %s0 = inlined_call_operand.vmem [shape: s32[2], index: 0, kind: input, shape index: {}]
  %s1 = inlined_call_operand.vmem [shape: f32[16,128], index: 1, kind: input, shape index: {}]
  %s2 = inlined_call_operand.vmem [shape: f32[128,128], index: 2, kind: input, shape index: {}]
  %s3 = inlined_call_operand.vmem [shape: f32[1,128], index: 3, kind: input, shape index: {}]
  %s4 = inlined_call_operand.vmem [shape: f32[128,16], index: 4, kind: input, shape index: {}]
  %s5 = inlined_call_operand.hbm [shape: f32[16,128], index: 5, kind: input, shape index: {}]
  %s6 = inlined_call_operand.vmem [shape: f32[1,128], index: 6, kind: input, shape index: {}]
  %s7 = inlined_call_operand.hbm [shape: f32[128,128], index: 7, kind: input, shape index: {}]
  %s8 = inlined_call_operand.vmem [shape: f32[1,128], index: 8, kind: input, shape index: {}]
  %s9 = inlined_call_operand.hbm [shape: f32[128,128], index: 9, kind: input, shape index: {}]
  %s10 = inlined_call_operand.vmem [shape: f32[1,128], index: 10, kind: input, shape index: {}]
  %s11 = inlined_call_operand.hbm [shape: f32[2,128], index: 11, kind: output, shape index: {0}]
  %s12 = inlined_call_operand.hbm [shape: f32[2,128], index: 12, kind: output, shape index: {1}]
  %13 = xla_tuple %s11, %s12
  %s14 = sld [smem:[#allocation0]]
  $region78: #{tpu_custom_call.1} parent=0
    _
  %s16 = ssub.s32 1, %s14
  %s17 = scalar_select 0, %s16, %s14
  $region1: #{tpu_custom_call.1} parent=0
    #allocation2 [shape = 'u8[512]{0}', space=smem, size = 0x200, scoped, tag = 'input window, operand 0, single buffered']
    #allocation3 [shape = 's32[1]{0}', space=sflag, size = 0x4, scoped, tag = 'scoped memory for tpu_custom_call.1']
    #allocation4 [shape = 's32[1]{0}', space=sflag, size = 0x4, scoped, tag = 'scoped memory for tpu_custom_call.1']
    #allocation5 [shape = 's32[1]{0}', space=sflag, size = 0x4, scoped, tag = 'scoped memory for tpu_custom_call.1']
    #allocation6 [shape = 'u8[8192]{0}', space=vmem, size = 0x2000, scoped, tag = 'input window, operand 5, single buffered']
    #allocation7 [shape = 'u8[65536]{0}', space=vmem, size = 0x10000, scoped, tag = 'input window, operand 7, single buffered']
    #allocation8 [shape = 's32[1]{0}', space=sflag, size = 0x4, scoped, tag = 'scoped memory for tpu_custom_call.1']
    #allocation9 [shape = 'u8[65536]{0}', space=vmem, size = 0x10000, scoped, tag = 'input window, operand 9, single buffered']
    #allocation10 [shape = 'u8[1024]{0}', space=vmem, size = 0x400, scoped, tag = 'output window, operand 0, single buffered']
    #allocation11 [shape = 'u8[1024]{0}', space=vmem, size = 0x400, scoped, tag = 'output window, operand 1, single buffered']
    #allocation12 [shape = 's32[1]{0}', space=sflag, size = 0x4, scoped, tag = 'scoped memory for tpu_custom_call.1']
    %18 = vsyncpa [#allocation5], 0
    %19 = vsyncpa [#allocation3], 0
    %20 = vsyncpa [#allocation8], 0
    %21 = vsyncpa [#allocation4], 0
    %22 = vsyncpa [#allocation12], 0
    // Predicated region
    $region2: #{tpu_custom_call.1} parent=1 // pred_check
      _
    $region3: #{tpu_custom_call.1} parent=1 // pred_check_branch
      %24 = sbr.rel (0) target = $region5
    $region4: #{tpu_custom_call.1} parent=1 // pred_region
      %s26 = ssub.s32 16, 16
      %27 = vsyncadd [#allocation5], %s26
      %s29 = sshll.u32 %s0, 4
      %s30 = int_to_ptr.vmem [resolvable:$true] %s29
      %32 = dma.vmem_to_smem %s30, 16, [#allocation2], [#allocation5]
    $region5: #{tpu_custom_call.1} parent=1 // pred_fallthru
      _
    // Predicated region
    $region6: #{tpu_custom_call.1} parent=1 // pred_check
      _
    $region7: #{tpu_custom_call.1} parent=1 // pred_check_branch
      %34 = sbr.rel (0) target = $region9
    $region8: #{tpu_custom_call.1} parent=1 // pred_region
      _
    $region9: #{tpu_custom_call.1} parent=1 // pred_fallthru
      _
    // Predicated region
    $region10: #{tpu_custom_call.1} parent=1 // pred_check
      _
    $region11: #{tpu_custom_call.1} parent=1 // pred_check_branch
      %36 = sbr.rel (0) target = $region13
    $region12: #{tpu_custom_call.1} parent=1 // pred_region
      _
    $region13: #{tpu_custom_call.1} parent=1 // pred_fallthru
      _
    // Predicated region
    $region14: #{tpu_custom_call.1} parent=1 // pred_check
      _
    $region15: #{tpu_custom_call.1} parent=1 // pred_check_branch
      %38 = sbr.rel (0) target = $region17
    $region16: #{tpu_custom_call.1} parent=1 // pred_region
      _
    $region17: #{tpu_custom_call.1} parent=1 // pred_fallthru
      _
    // Predicated region
    $region18: #{tpu_custom_call.1} parent=1 // pred_check
      _
    $region19: #{tpu_custom_call.1} parent=1 // pred_check_branch
      %40 = sbr.rel (0) target = $region21
    $region20: #{tpu_custom_call.1} parent=1 // pred_region
      _
    $region21: #{tpu_custom_call.1} parent=1 // pred_fallthru
      _
    // Predicated region
    $region22: #{tpu_custom_call.1} parent=1 // pred_check
      _
    $region23: #{tpu_custom_call.1} parent=1 // pred_check_branch
      %42 = sbr.rel (0) target = $region25
    $region24: #{tpu_custom_call.1} parent=1 // pred_region
      %s44 = ssub.s32 256, 256
      %45 = vsyncadd [#allocation3], %s44
      %s46 = sshll.u32 [#allocation6], 4
      %s47 = int_to_ptr.vmem [resolvable:$true] %s46
      %52 = dma.hbm_to_vmem [thread:$0]  %s5, 256, %s47, [#allocation3], 128, 128, 8
    $region25: #{tpu_custom_call.1} parent=1 // pred_fallthru
      _
    // Predicated region
    $region26: #{tpu_custom_call.1} parent=1 // pred_check
      _
    $region27: #{tpu_custom_call.1} parent=1 // pred_check_branch
      %54 = sbr.rel (0) target = $region29
    $region28: #{tpu_custom_call.1} parent=1 // pred_region
      _
    $region29: #{tpu_custom_call.1} parent=1 // pred_fallthru
      _
    // Predicated region
    $region30: #{tpu_custom_call.1} parent=1 // pred_check
      _
    $region31: #{tpu_custom_call.1} parent=1 // pred_check_branch
      %56 = sbr.rel (0) target = $region33
    $region32: #{tpu_custom_call.1} parent=1 // pred_region
      %s58 = ssub.s32 2048, 2048
      %59 = vsyncadd [#allocation8], %s58
      %s60 = sshll.u32 [#allocation7], 4
      %s61 = int_to_ptr.vmem [resolvable:$true] %s60
      %66 = dma.hbm_to_vmem [thread:$0]  %s7, 2048, %s61, [#allocation8], 128, 128, 8
    $region33: #{tpu_custom_call.1} parent=1 // pred_fallthru
      _
    // Predicated region
    $region34: #{tpu_custom_call.1} parent=1 // pred_check
      _
    $region35: #{tpu_custom_call.1} parent=1 // pred_check_branch
      %68 = sbr.rel (0) target = $region37
    $region36: #{tpu_custom_call.1} parent=1 // pred_region
      _
    $region37: #{tpu_custom_call.1} parent=1 // pred_fallthru
      _
    // Predicated region
    $region38: #{tpu_custom_call.1} parent=1 // pred_check
      _
    $region39: #{tpu_custom_call.1} parent=1 // pred_check_branch
      %70 = sbr.rel (0) target = $region41
    $region40: #{tpu_custom_call.1} parent=1 // pred_region
      %s72 = ssub.s32 2048, 2048
      %73 = vsyncadd [#allocation8], %s72
      %s74 = sshll.u32 [#allocation9], 4
      %s75 = int_to_ptr.vmem [resolvable:$true] %s74
      %80 = dma.hbm_to_vmem [thread:$0]  %s9, 2048, %s75, [#allocation8], 128, 128, 8
    $region41: #{tpu_custom_call.1} parent=1 // pred_fallthru
      _
    // Predicated region
    $region42: #{tpu_custom_call.1} parent=1 // pred_check
      _
    $region43: #{tpu_custom_call.1} parent=1 // pred_check_branch
      %82 = sbr.rel (0) target = $region45
    $region44: #{tpu_custom_call.1} parent=1 // pred_region
      _
    $region45: #{tpu_custom_call.1} parent=1 // pred_fallthru
      _
    // Predicated region
    $region46: #{tpu_custom_call.1} parent=1 // pred_check
      _
    $region47: #{tpu_custom_call.1} parent=1 // pred_check_branch
      %84 = sbr.rel (0) target = $region49
    $region48: #{tpu_custom_call.1} parent=1 // pred_region
      %85 = dma.done [#allocation5], 16
    $region49: #{tpu_custom_call.1} parent=1 // pred_fallthru
      _
    // Predicated region
    $region50: #{tpu_custom_call.1} parent=1 // pred_check
      _
    $region51: #{tpu_custom_call.1} parent=1 // pred_check_branch
      %87 = sbr.rel (0) target = $region53
    $region52: #{tpu_custom_call.1} parent=1 // pred_region
      %88 = dma.done [#allocation3], 256
    $region53: #{tpu_custom_call.1} parent=1 // pred_fallthru
      _
    // Predicated region
    $region54: #{tpu_custom_call.1} parent=1 // pred_check
      _
    $region55: #{tpu_custom_call.1} parent=1 // pred_check_branch
      %90 = sbr.rel (0) target = $region57
    $region56: #{tpu_custom_call.1} parent=1 // pred_region
      %91 = dma.done [#allocation8], 2048
    $region57: #{tpu_custom_call.1} parent=1 // pred_fallthru
      _
    // Predicated region
    $region58: #{tpu_custom_call.1} parent=1 // pred_check
      _
    $region59: #{tpu_custom_call.1} parent=1 // pred_check_branch
      %93 = sbr.rel (0) target = $region61
    $region60: #{tpu_custom_call.1} parent=1 // pred_region
      %94 = dma.done [#allocation8], 2048
    $region61: #{tpu_custom_call.1} parent=1 // pred_fallthru
      _
    %95 = sfence
    %s96 = sld [smem:[#allocation2]]
    %s97 = scalar_lea.vmem %s1, %s96
    %v98 = vld [vmem:[%s97] sm:$0x1]
    %s99 = sld [smem:[#allocation2 + $0x1]]
    %s100 = scalar_lea.vmem %s1, %s99
    %v101 = vld [vmem:[%s100] sm:$0x1]
    %v103 = vrot.slane %v101, 7
    %vm105 = vcmask 1040384
    %v106 = vsel %vm105, %v98, %v103
    %v107 = vld [vmem:[%s2] sm:$0xff]
    %v108 = vld [vmem:[%s2 + $0x8] sm:$0xff]
    %v109 = vld [vmem:[%s2 + $0x10] sm:$0xff]
    %v110 = vld [vmem:[%s2 + $0x18] sm:$0xff]
    %v111 = vld [vmem:[%s2 + $0x20] sm:$0xff]
    %v112 = vld [vmem:[%s2 + $0x28] sm:$0xff]
    %v113 = vld [vmem:[%s2 + $0x30] sm:$0xff]
    %v114 = vld [vmem:[%s2 + $0x38] sm:$0xff]
    %v115 = vld [vmem:[%s2 + $0x40] sm:$0xff]
    %v116 = vld [vmem:[%s2 + $0x48] sm:$0xff]
    %v117 = vld [vmem:[%s2 + $0x50] sm:$0xff]
    %v118 = vld [vmem:[%s2 + $0x58] sm:$0xff]
    %v119 = vld [vmem:[%s2 + $0x60] sm:$0xff]
    %v120 = vld [vmem:[%s2 + $0x68] sm:$0xff]
    %v121 = vld [vmem:[%s2 + $0x70] sm:$0xff]
    %v122 = vld [vmem:[%s2 + $0x78] sm:$0xff]
    %v123 = vld [vmem:[%s3] sm:$0x1]
    %v125 = vlaneseq
    %v126 = vshrl.u32 %v125, 7
    %v127 = vsub.s32 0, %v126
    %v128 = vrot.slane %v123, %v127
    %130 = vmatprep.subr.mxu0 0.0
    %131 = vmatpush1.msra.mxu0 %v122
    %132 = vmatprep.subr.mxu0 0.0
    %133 = vmatpush1.msra.mxu0 %v121
    %134 = vmatprep.subr.mxu0 0.0
    %135 = vmatpush1.msra.mxu0 %v120
    %136 = vmatprep.subr.mxu0 0.0
    %137 = vmatpush1.msra.mxu0 %v119
    %138 = vmatprep.subr.mxu0 0.0
    %139 = vmatpush1.msra.mxu0 %v118
    %140 = vmatprep.subr.mxu0 0.0
    %141 = vmatpush1.msra.mxu0 %v117
    %142 = vmatprep.subr.mxu0 0.0
    %143 = vmatpush1.msra.mxu0 %v116
    %144 = vmatprep.subr.mxu0 0.0
    %145 = vmatpush1.msra.mxu0 %v115
    %146 = vmatprep.subr.mxu0 0.0
    %147 = vmatpush1.msra.mxu0 %v114
    %148 = vmatprep.subr.mxu0 0.0
    %149 = vmatpush1.msra.mxu0 %v113
    %150 = vmatprep.subr.mxu0 0.0
    %151 = vmatpush1.msra.mxu0 %v112
    %152 = vmatprep.subr.mxu0 0.0
    %153 = vmatpush1.msra.mxu0 %v111
    %154 = vmatprep.subr.mxu0 0.0
    %155 = vmatpush1.msra.mxu0 %v110
    %156 = vmatprep.subr.mxu0 0.0
    %157 = vmatpush1.msra.mxu0 %v109
    %158 = vmatprep.subr.mxu0 0.0
    %159 = vmatpush1.msra.mxu0 %v108
    %160 = vmatprep.subr.mxu0 0.0
    %161 = vmatpush1.msra.mxu0 %v107
    %162 = vmatprep.subr.mxu0 0.0
    %163 = vmatpush2.msra.mxu0 0.0
    %164 = vmatprep.subr.mxu0 0.0
    %165 = vmatpush2.msra.mxu0 0.0
    %166 = vmatprep.subr.mxu0 0.0
    %167 = vmatpush2.msra.mxu0 0.0
    %168 = vmatprep.subr.mxu0 0.0
    %169 = vmatpush2.msra.mxu0 0.0
    %170 = vmatprep.subr.mxu0 0.0
    %171 = vmatpush2.msra.mxu0 0.0
    %172 = vmatprep.subr.mxu0 0.0
    %173 = vmatpush2.msra.mxu0 0.0
    %174 = vmatprep.subr.mxu0 0.0
    %175 = vmatpush2.msra.mxu0 0.0
    %176 = vmatprep.subr.mxu0 0.0
    %177 = vmatpush2.msra.mxu0 0.0
    %178 = vmatprep.subr.mxu0 0.0
    %179 = vmatpush2.msra.mxu0 0.0
    %180 = vmatprep.subr.mxu0 0.0
    %181 = vmatpush2.msra.mxu0 0.0
    %182 = vmatprep.subr.mxu0 0.0
    %183 = vmatpush2.msra.mxu0 0.0
    %184 = vmatprep.subr.mxu0 0.0
    %185 = vmatpush2.msra.mxu0 0.0
    %186 = vmatprep.subr.mxu0 0.0
    %187 = vmatpush2.msra.mxu0 0.0
    %188 = vmatprep.subr.mxu0 0.0
    %189 = vmatpush2.msra.mxu0 0.0
    %190 = vmatprep.subr.mxu0 0.0
    %191 = vmatpush2.msra.mxu0 0.0
    %192 = vmatprep.subr.mxu0 0.0
    %193 = vmatpush2.msra.mxu0 0.0
    %194 = vmatprep.mubr.f32.mxu0 0.0
    %195 = vmatmul.mubr.f32.gmra.mxu0 %v106
    %v196 = vpop.f32.mrf.mxu0
    %v197 = vadd.f32 %v128, %v196
    %v198 = vpop.f32.mrf.mxu0
    %199 = vdwg.mxu0
    %200 = vst [vmem:[#allocation10] sm:$0x3] %v197
    %v201 = vld [vmem:[%s4] sm:$0xff]
    %v202 = vld [vmem:[%s4 + $0x8] sm:$0xff]
    %v203 = vld [vmem:[%s4 + $0x10] sm:$0xff]
    %v204 = vld [vmem:[%s4 + $0x18] sm:$0xff]
    %v205 = vld [vmem:[%s4 + $0x20] sm:$0xff]
    %v206 = vld [vmem:[%s4 + $0x28] sm:$0xff]
    %v207 = vld [vmem:[%s4 + $0x30] sm:$0xff]
    %v208 = vld [vmem:[%s4 + $0x38] sm:$0xff]
    %v209 = vld [vmem:[%s4 + $0x40] sm:$0xff]
    %v210 = vld [vmem:[%s4 + $0x48] sm:$0xff]
    %v211 = vld [vmem:[%s4 + $0x50] sm:$0xff]
    %v212 = vld [vmem:[%s4 + $0x58] sm:$0xff]
    %v213 = vld [vmem:[%s4 + $0x60] sm:$0xff]
    %v214 = vld [vmem:[%s4 + $0x68] sm:$0xff]
    %v215 = vld [vmem:[%s4 + $0x70] sm:$0xff]
    %v216 = vld [vmem:[%s4 + $0x78] sm:$0xff]
    %v217 = vld [vmem:[#allocation6] sm:$0xff]
    %v218 = vld [vmem:[#allocation6 + $0x8] sm:$0xff]
    %v219 = vld [vmem:[%s6] sm:$0x1]
    %v221 = vlaneseq
    %v222 = vshrl.u32 %v221, 7
    %v223 = vsub.s32 0, %v222
    %v224 = vrot.slane %v219, %v223
    %vm226 = vcmask 130048
    %v228 = vsel %vm226, %v201, 0
    %v231 = vsel %vm226, %v202, 0
    %v234 = vsel %vm226, %v203, 0
    %v237 = vsel %vm226, %v204, 0
    %v240 = vsel %vm226, %v205, 0
    %v243 = vsel %vm226, %v206, 0
    %v246 = vsel %vm226, %v207, 0
    %v249 = vsel %vm226, %v208, 0
    %v252 = vsel %vm226, %v209, 0
    %v255 = vsel %vm226, %v210, 0
    %v258 = vsel %vm226, %v211, 0
    %v261 = vsel %vm226, %v212, 0
    %v264 = vsel %vm226, %v213, 0
    %v267 = vsel %vm226, %v214, 0
    %v270 = vsel %vm226, %v215, 0
    %v273 = vsel %vm226, %v216, 0
    %275 = vmatprep.subr.mxu0 0.0
    %276 = vmatpush1.msra.mxu0 0.0
    %277 = vmatprep.subr.mxu0 0.0
    %278 = vmatpush1.msra.mxu0 0.0
    %279 = vmatprep.subr.mxu0 0.0
    %280 = vmatpush1.msra.mxu0 0.0
    %281 = vmatprep.subr.mxu0 0.0
    %282 = vmatpush1.msra.mxu0 0.0
    %283 = vmatprep.subr.mxu0 0.0
    %284 = vmatpush1.msra.mxu0 0.0
    %285 = vmatprep.subr.mxu0 0.0
    %286 = vmatpush1.msra.mxu0 0.0
    %287 = vmatprep.subr.mxu0 0.0
    %288 = vmatpush1.msra.mxu0 0.0
    %289 = vmatprep.subr.mxu0 0.0
    %290 = vmatpush1.msra.mxu0 0.0
    %291 = vmatprep.subr.mxu0 0.0
    %292 = vmatpush1.msra.mxu0 0.0
    %293 = vmatprep.subr.mxu0 0.0
    %294 = vmatpush1.msra.mxu0 0.0
    %295 = vmatprep.subr.mxu0 0.0
    %296 = vmatpush1.msra.mxu0 0.0
    %297 = vmatprep.subr.mxu0 0.0
    %298 = vmatpush1.msra.mxu0 0.0
    %299 = vmatprep.subr.mxu0 0.0
    %300 = vmatpush1.msra.mxu0 0.0
    %301 = vmatprep.subr.mxu0 0.0
    %302 = vmatpush1.msra.mxu0 0.0
    %303 = vmatprep.subr.mxu0 0.0
    %304 = vmatpush1.msra.mxu0 %v218
    %305 = vmatprep.subr.mxu0 0.0
    %306 = vmatpush1.msra.mxu0 %v217
    %307 = vmatprep.subr.mxu0 0.0
    %308 = vmatpush2.msra.mxu0 0.0
    %309 = vmatprep.subr.mxu0 0.0
    %310 = vmatpush2.msra.mxu0 0.0
    %311 = vmatprep.subr.mxu0 0.0
    %312 = vmatpush2.msra.mxu0 0.0
    %313 = vmatprep.subr.mxu0 0.0
    %314 = vmatpush2.msra.mxu0 0.0
    %315 = vmatprep.subr.mxu0 0.0
    %316 = vmatpush2.msra.mxu0 0.0
    %317 = vmatprep.subr.mxu0 0.0
    %318 = vmatpush2.msra.mxu0 0.0
    %319 = vmatprep.subr.mxu0 0.0
    %320 = vmatpush2.msra.mxu0 0.0
    %321 = vmatprep.subr.mxu0 0.0
    %322 = vmatpush2.msra.mxu0 0.0
    %323 = vmatprep.subr.mxu0 0.0
    %324 = vmatpush2.msra.mxu0 0.0
    %325 = vmatprep.subr.mxu0 0.0
    %326 = vmatpush2.msra.mxu0 0.0
    %327 = vmatprep.subr.mxu0 0.0
    %328 = vmatpush2.msra.mxu0 0.0
    %329 = vmatprep.subr.mxu0 0.0
    %330 = vmatpush2.msra.mxu0 0.0
    %331 = vmatprep.subr.mxu0 0.0
    %332 = vmatpush2.msra.mxu0 0.0
    %333 = vmatprep.subr.mxu0 0.0
    %334 = vmatpush2.msra.mxu0 0.0
    %335 = vmatprep.subr.mxu0 0.0
    %336 = vmatpush2.msra.mxu0 0.0
    %337 = vmatprep.subr.mxu0 0.0
    %338 = vmatpush2.msra.mxu0 0.0
    %339 = vmatprep.mubr.f32.mxu0 0.0
    %340 = vmatmul.mubr.f32.gmra.mxu0 %v228
    %v341 = vpop.f32.mrf.mxu0
    %v342 = vadd.f32 %v224, %v341
    %v343 = vpop.f32.mrf.mxu0
    %344 = vmatprep.mubr.f32.mxu0 0.0
    %345 = vmatmul.mubr.f32.gmra.mxu0 %v231
    %v346 = vpop.f32.mrf.mxu0
    %v347 = vadd.f32 %v224, %v346
    %v348 = vpop.f32.mrf.mxu0
    %349 = vmatprep.mubr.f32.mxu0 0.0
    %350 = vmatmul.mubr.f32.gmra.mxu0 %v234
    %v351 = vpop.f32.mrf.mxu0
    %v352 = vadd.f32 %v224, %v351
    %v353 = vpop.f32.mrf.mxu0
    %354 = vmatprep.mubr.f32.mxu0 0.0
    %355 = vmatmul.mubr.f32.gmra.mxu0 %v237
    %v356 = vpop.f32.mrf.mxu0
    %v357 = vadd.f32 %v224, %v356
    %v358 = vpop.f32.mrf.mxu0
    %359 = vmatprep.mubr.f32.mxu0 0.0
    %360 = vmatmul.mubr.f32.gmra.mxu0 %v240
    %v361 = vpop.f32.mrf.mxu0
    %v362 = vadd.f32 %v224, %v361
    %v363 = vpop.f32.mrf.mxu0
    %364 = vmatprep.mubr.f32.mxu0 0.0
    %365 = vmatmul.mubr.f32.gmra.mxu0 %v243
    %v366 = vpop.f32.mrf.mxu0
    %v367 = vadd.f32 %v224, %v366
    %v368 = vpop.f32.mrf.mxu0
    %369 = vmatprep.mubr.f32.mxu0 0.0
    %370 = vmatmul.mubr.f32.gmra.mxu0 %v246
    %v371 = vpop.f32.mrf.mxu0
    %v372 = vadd.f32 %v224, %v371
    %v373 = vpop.f32.mrf.mxu0
    %374 = vmatprep.mubr.f32.mxu0 0.0
    %375 = vmatmul.mubr.f32.gmra.mxu0 %v249
    %v376 = vpop.f32.mrf.mxu0
    %v377 = vadd.f32 %v224, %v376
    %v378 = vpop.f32.mrf.mxu0
    %379 = vmatprep.mubr.f32.mxu0 0.0
    %380 = vmatmul.mubr.f32.gmra.mxu0 %v252
    %v381 = vpop.f32.mrf.mxu0
    %v382 = vadd.f32 %v224, %v381
    %v383 = vpop.f32.mrf.mxu0
    %384 = vmatprep.mubr.f32.mxu0 0.0
    %385 = vmatmul.mubr.f32.gmra.mxu0 %v255
    %v386 = vpop.f32.mrf.mxu0
    %v387 = vadd.f32 %v224, %v386
    %v388 = vpop.f32.mrf.mxu0
    %389 = vmatprep.mubr.f32.mxu0 0.0
    %390 = vmatmul.mubr.f32.gmra.mxu0 %v258
    %v391 = vpop.f32.mrf.mxu0
    %v392 = vadd.f32 %v224, %v391
    %v393 = vpop.f32.mrf.mxu0
    %394 = vmatprep.mubr.f32.mxu0 0.0
    %395 = vmatmul.mubr.f32.gmra.mxu0 %v261
    %v396 = vpop.f32.mrf.mxu0
    %v397 = vadd.f32 %v224, %v396
    %v398 = vpop.f32.mrf.mxu0
    %399 = vmatprep.mubr.f32.mxu0 0.0
    %400 = vmatmul.mubr.f32.gmra.mxu0 %v264
    %v401 = vpop.f32.mrf.mxu0
    %v402 = vadd.f32 %v224, %v401
    %v403 = vpop.f32.mrf.mxu0
    %404 = vmatprep.mubr.f32.mxu0 0.0
    %405 = vmatmul.mubr.f32.gmra.mxu0 %v267
    %v406 = vpop.f32.mrf.mxu0
    %v407 = vadd.f32 %v224, %v406
    %v408 = vpop.f32.mrf.mxu0
    %409 = vmatprep.mubr.f32.mxu0 0.0
    %410 = vmatmul.mubr.f32.gmra.mxu0 %v270
    %v411 = vpop.f32.mrf.mxu0
    %v412 = vadd.f32 %v224, %v411
    %v413 = vpop.f32.mrf.mxu0
    %414 = vmatprep.mubr.f32.mxu0 0.0
    %415 = vmatmul.mubr.f32.gmra.mxu0 %v273
    %v416 = vpop.f32.mrf.mxu0
    %v417 = vadd.f32 %v224, %v416
    %v418 = vpop.f32.mrf.mxu0
    %419 = vdwg.mxu0
    %v420 = vmax.f32 %v342, 0.0
    %v421 = vmax.f32 %v347, 0.0
    %v422 = vmax.f32 %v352, 0.0
    %v423 = vmax.f32 %v357, 0.0
    %v424 = vmax.f32 %v362, 0.0
    %v425 = vmax.f32 %v367, 0.0
    %v426 = vmax.f32 %v372, 0.0
    %v427 = vmax.f32 %v377, 0.0
    %v428 = vmax.f32 %v382, 0.0
    %v429 = vmax.f32 %v387, 0.0
    %v430 = vmax.f32 %v392, 0.0
    %v431 = vmax.f32 %v397, 0.0
    %v432 = vmax.f32 %v402, 0.0
    %v433 = vmax.f32 %v407, 0.0
    %v434 = vmax.f32 %v412, 0.0
    %v435 = vmax.f32 %v417, 0.0
    %v436 = vld [vmem:[#allocation7] sm:$0xff]
    %v437 = vld [vmem:[#allocation7 + $0x8] sm:$0xff]
    %v438 = vld [vmem:[#allocation7 + $0x10] sm:$0xff]
    %v439 = vld [vmem:[#allocation7 + $0x18] sm:$0xff]
    %v440 = vld [vmem:[#allocation7 + $0x20] sm:$0xff]
    %v441 = vld [vmem:[#allocation7 + $0x28] sm:$0xff]
    %v442 = vld [vmem:[#allocation7 + $0x30] sm:$0xff]
    %v443 = vld [vmem:[#allocation7 + $0x38] sm:$0xff]
    %v444 = vld [vmem:[#allocation7 + $0x40] sm:$0xff]
    %v445 = vld [vmem:[#allocation7 + $0x48] sm:$0xff]
    %v446 = vld [vmem:[#allocation7 + $0x50] sm:$0xff]
    %v447 = vld [vmem:[#allocation7 + $0x58] sm:$0xff]
    %v448 = vld [vmem:[#allocation7 + $0x60] sm:$0xff]
    %v449 = vld [vmem:[#allocation7 + $0x68] sm:$0xff]
    %v450 = vld [vmem:[#allocation7 + $0x70] sm:$0xff]
    %v451 = vld [vmem:[#allocation7 + $0x78] sm:$0xff]
    %v452 = vld [vmem:[%s8] sm:$0x1]
    %v454 = vlaneseq
    %v455 = vshrl.u32 %v454, 7
    %v456 = vsub.s32 0, %v455
    %v457 = vrot.slane %v452, %v456
    %459 = vmatprep.subr.mxu0 0.0
    %460 = vmatpush1.msra.mxu0 %v451
    %461 = vmatprep.subr.mxu0 0.0
    %462 = vmatpush1.msra.mxu0 %v450
    %463 = vmatprep.subr.mxu0 0.0
    %464 = vmatpush1.msra.mxu0 %v449
    %465 = vmatprep.subr.mxu0 0.0
    %466 = vmatpush1.msra.mxu0 %v448
    %467 = vmatprep.subr.mxu0 0.0
    %468 = vmatpush1.msra.mxu0 %v447
    %469 = vmatprep.subr.mxu0 0.0
    %470 = vmatpush1.msra.mxu0 %v446
    %471 = vmatprep.subr.mxu0 0.0
    %472 = vmatpush1.msra.mxu0 %v445
    %473 = vmatprep.subr.mxu0 0.0
    %474 = vmatpush1.msra.mxu0 %v444
    %475 = vmatprep.subr.mxu0 0.0
    %476 = vmatpush1.msra.mxu0 %v443
    %477 = vmatprep.subr.mxu0 0.0
    %478 = vmatpush1.msra.mxu0 %v442
    %479 = vmatprep.subr.mxu0 0.0
    %480 = vmatpush1.msra.mxu0 %v441
    %481 = vmatprep.subr.mxu0 0.0
    %482 = vmatpush1.msra.mxu0 %v440
    %483 = vmatprep.subr.mxu0 0.0
    %484 = vmatpush1.msra.mxu0 %v439
    %485 = vmatprep.subr.mxu0 0.0
    %486 = vmatpush1.msra.mxu0 %v438
    %487 = vmatprep.subr.mxu0 0.0
    %488 = vmatpush1.msra.mxu0 %v437
    %489 = vmatprep.subr.mxu0 0.0
    %490 = vmatpush1.msra.mxu0 %v436
    %491 = vmatprep.subr.mxu0 0.0
    %492 = vmatpush2.msra.mxu0 0.0
    %493 = vmatprep.subr.mxu0 0.0
    %494 = vmatpush2.msra.mxu0 0.0
    %495 = vmatprep.subr.mxu0 0.0
    %496 = vmatpush2.msra.mxu0 0.0
    %497 = vmatprep.subr.mxu0 0.0
    %498 = vmatpush2.msra.mxu0 0.0
    %499 = vmatprep.subr.mxu0 0.0
    %500 = vmatpush2.msra.mxu0 0.0
    %501 = vmatprep.subr.mxu0 0.0
    %502 = vmatpush2.msra.mxu0 0.0
    %503 = vmatprep.subr.mxu0 0.0
    %504 = vmatpush2.msra.mxu0 0.0
    %505 = vmatprep.subr.mxu0 0.0
    %506 = vmatpush2.msra.mxu0 0.0
    %507 = vmatprep.subr.mxu0 0.0
    %508 = vmatpush2.msra.mxu0 0.0
    %509 = vmatprep.subr.mxu0 0.0
    %510 = vmatpush2.msra.mxu0 0.0
    %511 = vmatprep.subr.mxu0 0.0
    %512 = vmatpush2.msra.mxu0 0.0
    %513 = vmatprep.subr.mxu0 0.0
    %514 = vmatpush2.msra.mxu0 0.0
    %515 = vmatprep.subr.mxu0 0.0
    %516 = vmatpush2.msra.mxu0 0.0
    %517 = vmatprep.subr.mxu0 0.0
    %518 = vmatpush2.msra.mxu0 0.0
    %519 = vmatprep.subr.mxu0 0.0
    %520 = vmatpush2.msra.mxu0 0.0
    %521 = vmatprep.subr.mxu0 0.0
    %522 = vmatpush2.msra.mxu0 0.0
    %523 = vmatprep.mubr.f32.mxu0 0.0
    %524 = vmatmul.mubr.f32.gmra.mxu0 %v420
    %v525 = vpop.f32.mrf.mxu0
    %v526 = vadd.f32 %v457, %v525
    %v527 = vpop.f32.mrf.mxu0
    %528 = vmatprep.mubr.f32.mxu0 0.0
    %529 = vmatmul.mubr.f32.gmra.mxu0 %v421
    %v530 = vpop.f32.mrf.mxu0
    %v531 = vadd.f32 %v457, %v530
    %v532 = vpop.f32.mrf.mxu0
    %533 = vmatprep.mubr.f32.mxu0 0.0
    %534 = vmatmul.mubr.f32.gmra.mxu0 %v422
    %v535 = vpop.f32.mrf.mxu0
    %v536 = vadd.f32 %v457, %v535
    %v537 = vpop.f32.mrf.mxu0
    %538 = vmatprep.mubr.f32.mxu0 0.0
    %539 = vmatmul.mubr.f32.gmra.mxu0 %v423
    %v540 = vpop.f32.mrf.mxu0
    %v541 = vadd.f32 %v457, %v540
    %v542 = vpop.f32.mrf.mxu0
    %543 = vmatprep.mubr.f32.mxu0 0.0
    %544 = vmatmul.mubr.f32.gmra.mxu0 %v424
    %v545 = vpop.f32.mrf.mxu0
    %v546 = vadd.f32 %v457, %v545
    %v547 = vpop.f32.mrf.mxu0
    %548 = vmatprep.mubr.f32.mxu0 0.0
    %549 = vmatmul.mubr.f32.gmra.mxu0 %v425
    %v550 = vpop.f32.mrf.mxu0
    %v551 = vadd.f32 %v457, %v550
    %v552 = vpop.f32.mrf.mxu0
    %553 = vmatprep.mubr.f32.mxu0 0.0
    %554 = vmatmul.mubr.f32.gmra.mxu0 %v426
    %v555 = vpop.f32.mrf.mxu0
    %v556 = vadd.f32 %v457, %v555
    %v557 = vpop.f32.mrf.mxu0
    %558 = vmatprep.mubr.f32.mxu0 0.0
    %559 = vmatmul.mubr.f32.gmra.mxu0 %v427
    %v560 = vpop.f32.mrf.mxu0
    %v561 = vadd.f32 %v457, %v560
    %v562 = vpop.f32.mrf.mxu0
    %563 = vmatprep.mubr.f32.mxu0 0.0
    %564 = vmatmul.mubr.f32.gmra.mxu0 %v428
    %v565 = vpop.f32.mrf.mxu0
    %v566 = vadd.f32 %v457, %v565
    %v567 = vpop.f32.mrf.mxu0
    %568 = vmatprep.mubr.f32.mxu0 0.0
    %569 = vmatmul.mubr.f32.gmra.mxu0 %v429
    %v570 = vpop.f32.mrf.mxu0
    %v571 = vadd.f32 %v457, %v570
    %v572 = vpop.f32.mrf.mxu0
    %573 = vmatprep.mubr.f32.mxu0 0.0
    %574 = vmatmul.mubr.f32.gmra.mxu0 %v430
    %v575 = vpop.f32.mrf.mxu0
    %v576 = vadd.f32 %v457, %v575
    %v577 = vpop.f32.mrf.mxu0
    %578 = vmatprep.mubr.f32.mxu0 0.0
    %579 = vmatmul.mubr.f32.gmra.mxu0 %v431
    %v580 = vpop.f32.mrf.mxu0
    %v581 = vadd.f32 %v457, %v580
    %v582 = vpop.f32.mrf.mxu0
    %583 = vmatprep.mubr.f32.mxu0 0.0
    %584 = vmatmul.mubr.f32.gmra.mxu0 %v432
    %v585 = vpop.f32.mrf.mxu0
    %v586 = vadd.f32 %v457, %v585
    %v587 = vpop.f32.mrf.mxu0
    %588 = vmatprep.mubr.f32.mxu0 0.0
    %589 = vmatmul.mubr.f32.gmra.mxu0 %v433
    %v590 = vpop.f32.mrf.mxu0
    %v591 = vadd.f32 %v457, %v590
    %v592 = vpop.f32.mrf.mxu0
    %593 = vmatprep.mubr.f32.mxu0 0.0
    %594 = vmatmul.mubr.f32.gmra.mxu0 %v434
    %v595 = vpop.f32.mrf.mxu0
    %v596 = vadd.f32 %v457, %v595
    %v597 = vpop.f32.mrf.mxu0
    %598 = vmatprep.mubr.f32.mxu0 0.0
    %599 = vmatmul.mubr.f32.gmra.mxu0 %v435
    %v600 = vpop.f32.mrf.mxu0
    %v601 = vadd.f32 %v457, %v600
    %v602 = vpop.f32.mrf.mxu0
    %603 = vdwg.mxu0
    %v604 = vmax.f32 %v526, 0.0
    %v605 = vmax.f32 %v531, 0.0
    %v606 = vmax.f32 %v536, 0.0
    %v607 = vmax.f32 %v541, 0.0
    %v608 = vmax.f32 %v546, 0.0
    %v609 = vmax.f32 %v551, 0.0
    %v610 = vmax.f32 %v556, 0.0
    %v611 = vmax.f32 %v561, 0.0
    %v612 = vmax.f32 %v566, 0.0
    %v613 = vmax.f32 %v571, 0.0
    %v614 = vmax.f32 %v576, 0.0
    %v615 = vmax.f32 %v581, 0.0
    %v616 = vmax.f32 %v586, 0.0
    %v617 = vmax.f32 %v591, 0.0
    %v618 = vmax.f32 %v596, 0.0
    %v619 = vmax.f32 %v601, 0.0
    %v620 = vmax.f32 %v604, %v608
    %v621 = vmax.f32 %v605, %v609
    %v622 = vmax.f32 %v606, %v610
    %v623 = vmax.f32 %v607, %v611
    %v624 = vmax.f32 %v620, %v621
    %v625 = vmax.f32 %v622, %v623
    %v626 = vmax.f32 %v624, %v625
    %v627 = vrot.slane %v626, 4
    %v628 = vmax.f32 %v626, %v627
    %v629 = vrot.slane %v628, 2
    %v630 = vmax.f32 %v628, %v629
    %v631 = vrot.slane %v630, 1
    %v632 = vmax.f32 %v630, %v631
    %v633 = vmax.f32 %v612, %v616
    %v634 = vmax.f32 %v613, %v617
    %v635 = vmax.f32 %v614, %v618
    %v636 = vmax.f32 %v615, %v619
    %v637 = vmax.f32 %v633, %v634
    %v638 = vmax.f32 %v635, %v636
    %v639 = vmax.f32 %v637, %v638
    %v640 = vrot.slane %v639, 4
    %v641 = vmax.f32 %v639, %v640
    %v642 = vrot.slane %v641, 2
    %v643 = vmax.f32 %v641, %v642
    %v644 = vrot.slane %v643, 1
    %v645 = vmax.f32 %v643, %v644
    %v646 = vsel %vm105, %v632, %v645
    %v647 = vld [vmem:[#allocation9] sm:$0xff]
    %v648 = vld [vmem:[#allocation9 + $0x8] sm:$0xff]
    %v649 = vld [vmem:[#allocation9 + $0x10] sm:$0xff]
    %v650 = vld [vmem:[#allocation9 + $0x18] sm:$0xff]
    %v651 = vld [vmem:[#allocation9 + $0x20] sm:$0xff]
    %v652 = vld [vmem:[#allocation9 + $0x28] sm:$0xff]
    %v653 = vld [vmem:[#allocation9 + $0x30] sm:$0xff]
    %v654 = vld [vmem:[#allocation9 + $0x38] sm:$0xff]
    %v655 = vld [vmem:[#allocation9 + $0x40] sm:$0xff]
    %v656 = vld [vmem:[#allocation9 + $0x48] sm:$0xff]
    %v657 = vld [vmem:[#allocation9 + $0x50] sm:$0xff]
    %v658 = vld [vmem:[#allocation9 + $0x58] sm:$0xff]
    %v659 = vld [vmem:[#allocation9 + $0x60] sm:$0xff]
    %v660 = vld [vmem:[#allocation9 + $0x68] sm:$0xff]
    %v661 = vld [vmem:[#allocation9 + $0x70] sm:$0xff]
    %v662 = vld [vmem:[#allocation9 + $0x78] sm:$0xff]
    %v663 = vld [vmem:[%s10] sm:$0x1]
    %v665 = vlaneseq
    %v666 = vshrl.u32 %v665, 7
    %v667 = vsub.s32 0, %v666
    %v668 = vrot.slane %v663, %v667
    %670 = vmatprep.subr.mxu0 0.0
    %671 = vmatpush1.msra.mxu0 %v662
    %672 = vmatprep.subr.mxu0 0.0
    %673 = vmatpush1.msra.mxu0 %v661
    %674 = vmatprep.subr.mxu0 0.0
    %675 = vmatpush1.msra.mxu0 %v660
    %676 = vmatprep.subr.mxu0 0.0
    %677 = vmatpush1.msra.mxu0 %v659
    %678 = vmatprep.subr.mxu0 0.0
    %679 = vmatpush1.msra.mxu0 %v658
    %680 = vmatprep.subr.mxu0 0.0
    %681 = vmatpush1.msra.mxu0 %v657
    %682 = vmatprep.subr.mxu0 0.0
    %683 = vmatpush1.msra.mxu0 %v656
    %684 = vmatprep.subr.mxu0 0.0
    %685 = vmatpush1.msra.mxu0 %v655
    %686 = vmatprep.subr.mxu0 0.0
    %687 = vmatpush1.msra.mxu0 %v654
    %688 = vmatprep.subr.mxu0 0.0
    %689 = vmatpush1.msra.mxu0 %v653
    %690 = vmatprep.subr.mxu0 0.0
    %691 = vmatpush1.msra.mxu0 %v652
    %692 = vmatprep.subr.mxu0 0.0
    %693 = vmatpush1.msra.mxu0 %v651
    %694 = vmatprep.subr.mxu0 0.0
    %695 = vmatpush1.msra.mxu0 %v650
    %696 = vmatprep.subr.mxu0 0.0
    %697 = vmatpush1.msra.mxu0 %v649
    %698 = vmatprep.subr.mxu0 0.0
    %699 = vmatpush1.msra.mxu0 %v648
    %700 = vmatprep.subr.mxu0 0.0
    %701 = vmatpush1.msra.mxu0 %v647
    %702 = vmatprep.subr.mxu0 0.0
    %703 = vmatpush2.msra.mxu0 0.0
    %704 = vmatprep.subr.mxu0 0.0
    %705 = vmatpush2.msra.mxu0 0.0
    %706 = vmatprep.subr.mxu0 0.0
    %707 = vmatpush2.msra.mxu0 0.0
    %708 = vmatprep.subr.mxu0 0.0
    %709 = vmatpush2.msra.mxu0 0.0
    %710 = vmatprep.subr.mxu0 0.0
    %711 = vmatpush2.msra.mxu0 0.0
    %712 = vmatprep.subr.mxu0 0.0
    %713 = vmatpush2.msra.mxu0 0.0
    %714 = vmatprep.subr.mxu0 0.0
    %715 = vmatpush2.msra.mxu0 0.0
    %716 = vmatprep.subr.mxu0 0.0
    %717 = vmatpush2.msra.mxu0 0.0
    %718 = vmatprep.subr.mxu0 0.0
    %719 = vmatpush2.msra.mxu0 0.0
    %720 = vmatprep.subr.mxu0 0.0
    %721 = vmatpush2.msra.mxu0 0.0
    %722 = vmatprep.subr.mxu0 0.0
    %723 = vmatpush2.msra.mxu0 0.0
    %724 = vmatprep.subr.mxu0 0.0
    %725 = vmatpush2.msra.mxu0 0.0
    %726 = vmatprep.subr.mxu0 0.0
    %727 = vmatpush2.msra.mxu0 0.0
    %728 = vmatprep.subr.mxu0 0.0
    %729 = vmatpush2.msra.mxu0 0.0
    %730 = vmatprep.subr.mxu0 0.0
    %731 = vmatpush2.msra.mxu0 0.0
    %732 = vmatprep.subr.mxu0 0.0
    %733 = vmatpush2.msra.mxu0 0.0
    %734 = vmatprep.mubr.f32.mxu0 0.0
    %735 = vmatmul.mubr.f32.gmra.mxu0 %v646
    %v736 = vpop.f32.mrf.mxu0
    %v737 = vadd.f32 %v668, %v736
    %v738 = vpop.f32.mrf.mxu0
    %739 = vdwg.mxu0
    %740 = vst [vmem:[#allocation11] sm:$0x3] %v737
    // Predicated region
    $region62: #{tpu_custom_call.1} parent=1 // pred_check
      _
    $region63: #{tpu_custom_call.1} parent=1 // pred_check_branch
      %742 = sbr.rel (0) target = $region65
    $region64: #{tpu_custom_call.1} parent=1 // pred_region
      %s744 = ssub.s32 32, 32
      %745 = vsyncadd [#allocation4], %s744
      %s747 = sshll.u32 [#allocation10], 4
      %s748 = int_to_ptr.vmem [resolvable:$true] %s747
      %750 = dma.vmem_to_hbm [thread:$0]  %s748, 32, %s11, [#allocation4]
    $region65: #{tpu_custom_call.1} parent=1 // pred_fallthru
      _
    // Predicated region
    $region66: #{tpu_custom_call.1} parent=1 // pred_check
      _
    $region67: #{tpu_custom_call.1} parent=1 // pred_check_branch
      %752 = sbr.rel (0) target = $region69
    $region68: #{tpu_custom_call.1} parent=1 // pred_region
      %s754 = ssub.s32 32, 32
      %755 = vsyncadd [#allocation12], %s754
      %s757 = sshll.u32 [#allocation11], 4
      %s758 = int_to_ptr.vmem [resolvable:$true] %s757
      %760 = dma.vmem_to_hbm [thread:$0]  %s758, 32, %s12, [#allocation12]
    $region69: #{tpu_custom_call.1} parent=1 // pred_fallthru
      _
    // Predicated region
    $region70: #{tpu_custom_call.1} parent=1 // pred_check
      _
    $region71: #{tpu_custom_call.1} parent=1 // pred_check_branch
      %762 = sbr.rel (0) target = $region73
    $region72: #{tpu_custom_call.1} parent=1 // pred_region
      %763 = dma.done [#allocation4], 32
    $region73: #{tpu_custom_call.1} parent=1 // pred_fallthru
      _
    // Predicated region
    $region74: #{tpu_custom_call.1} parent=1 // pred_check
      _
    $region75: #{tpu_custom_call.1} parent=1 // pred_check_branch
      %765 = sbr.rel (0) target = $region77
    $region76: #{tpu_custom_call.1} parent=1 // pred_region
      %766 = dma.done [#allocation12], 32
    $region77: #{tpu_custom_call.1} parent=1 // pred_fallthru
      _
    %767 = vsyncpa [#allocation3], 1
    %768 = vsyncpa [#allocation8], 1
    %769 = vsyncpa [#allocation4], 1
    %770 = vsyncpa [#allocation12], 1
    %771 = vsyncpa [#allocation5], 1

</llo_original>
